<compile_context>
chip_gen: v7x
topology: tpu7x:2x2x1
jax: 0.10.0
libtpu: 0.0.40
codegen_flags: <defaults>
</compile_context>

<pallas_src>
import jax
import jax.numpy as jnp
import numpy as np
from jax.experimental import pallas as pl
from jax.experimental.pallas import tpu as pltpu

# ----------------------------- configuration -----------------------------
N = 256            # batch rows
IN_F = 256         # in_features
OUT_F = 128        # out_features (lane-dense output)
BN_EPS = 1e-4
LEAKY_SLOPE = 0.01


# ----------------- fused: Linear -> BatchNorm1d (train) -> LeakyReLU -----------------
def fused_kernel(x_ref, w_ref, o_ref):
    """x_ref: (N, IN_F) f32, w_ref: (IN_F, OUT_F) f32, o_ref: (N, OUT_F) f32.

    Everything is resident in VMEM (single invocation, full blocks), so the matmul
    result z never touches HBM and the batch statistics are computed exactly once.
    """
    # Linear (no bias): one MXU matmul, f32 accumulation.
    z = jnp.dot(x_ref[...], w_ref[...], preferred_element_type=jnp.float32)

    # BatchNorm1d, training mode, affine=False: global batch mean + biased variance
    # per output feature.  Centered (two-pass) variance avoids E[z^2]-E[z]^2 cancellation.
    mean = jnp.mean(z, axis=0, keepdims=True)           # (1, OUT_F)
    centered = z - mean
    var = jnp.mean(centered * centered, axis=0, keepdims=True)   # biased variance
    inv = jax.lax.rsqrt(var + BN_EPS)                   # EUP rsqrt, computed once
    y = centered * inv

    # LeakyReLU, default negative_slope=0.01.
    o_ref[...] = jnp.where(y >= 0, y, LEAKY_SLOPE * y)


def linear_bn_leakyrelu(x, w):
    """x: (N, IN_F) f32, w: (IN_F, OUT_F) f32 (transposed vs torch's (out, in)). -> (N, OUT_F)."""
    return pl.pallas_call(
        fused_kernel,
        out_shape=jax.ShapeDtypeStruct((N, OUT_F), jnp.float32),
        in_specs=[
            pl.BlockSpec(memory_space=pltpu.MemorySpace.VMEM),   # x fully resident
            pl.BlockSpec(memory_space=pltpu.MemorySpace.VMEM),   # w fully resident
        ],
        out_specs=pl.BlockSpec(memory_space=pltpu.MemorySpace.VMEM),
        cost_estimate=pl.CostEstimate(
            flops=2 * N * IN_F * OUT_F + 6 * N * OUT_F,
            transcendentals=OUT_F,
            bytes_accessed=4 * (N * IN_F + IN_F * OUT_F + N * OUT_F)),
    )(x, w)


# ----------------------------- pure-JAX reference -----------------------------
def reference(x, w):
    z = x @ w
    mean = jnp.mean(z, axis=0, keepdims=True)
    var = jnp.mean((z - mean) ** 2, axis=0, keepdims=True)   # biased variance
    y = (z - mean) / jnp.sqrt(var + BN_EPS)
    return jnp.where(y >= 0, y, LEAKY_SLOPE * y)


# ----------------------------- main -----------------------------
if __name__ == "__main__":
    key = jax.random.PRNGKey(0)
    k_x, k_w = jax.random.split(key, 2)

    # torch Linear weight is (out_features, in_features); stored here pre-transposed (in, out).
    x = jax.random.normal(k_x, (N, IN_F), dtype=jnp.float32)
    w = jax.random.normal(k_w, (IN_F, OUT_F), dtype=jnp.float32) * 0.05

    out = jax.block_until_ready(linear_bn_leakyrelu(x, w))
    ref = jax.block_until_ready(reference(x, w))

    assert out.shape == (N, OUT_F) and out.dtype == jnp.float32
    np.testing.assert_allclose(np.asarray(out), np.asarray(ref), rtol=1e-4, atol=1e-4)
    print("KERNEL_OK")
</pallas_src>

<mosaic_0001>
module attributes {stable_mosaic.version = 11 : i64} {
  func.func @fused_kernel(%arg0: memref<256x256xf32, #tpu.memory_space<vmem>>, %arg1: memref<256x128xf32, #tpu.memory_space<vmem>>, %arg2: memref<256x128xf32, #tpu.memory_space<vmem>>) attributes {dimension_semantics = [], scalar_prefetch = 0 : i64, scratch_operands = 0 : i64, tpu.core_type = #tpu.core_type<tc>} {
    %c0 = arith.constant 0 : index
    %c0_0 = arith.constant 0 : index
    %0 = vector.load %arg0[%c0, %c0_0] : memref<256x256xf32, #tpu.memory_space<vmem>>, vector<256x256xf32>
    %c0_1 = arith.constant 0 : index
    %c0_2 = arith.constant 0 : index
    %1 = vector.load %arg1[%c0_1, %c0_2] : memref<256x128xf32, #tpu.memory_space<vmem>>, vector<256x128xf32>
    %cst = arith.constant dense<0.000000e+00> : vector<256x128xf32>
    %2 = tpu.matmul %0, %1, %cst {dimension_numbers = #tpu.dot_dimension_numbers<[1], [0], [0], [1], [0, 0, 1, 1], [], []>} : vector<256x256xf32>, vector<256x128xf32>, vector<256x128xf32> -> vector<256x128xf32>
    %cst_3 = arith.constant dense<0.000000e+00> : vector<128xf32>
    %3 = vector.multi_reduction <add>, %2, %cst_3 [0] : vector<256x128xf32> to vector<128xf32>
    %4 = vector.shape_cast %3 : vector<128xf32> to vector<1x128xf32>
    %cst_4 = arith.constant 2.560000e+02 : f32
    %5 = vector.broadcast %cst_4 : f32 to vector<1x128xf32>
    %6 = arith.divf %4, %5 : vector<1x128xf32>
    %7 = vector.broadcast %6 : vector<1x128xf32> to vector<256x128xf32>
    %8 = arith.subf %2, %7 : vector<256x128xf32>
    %9 = arith.mulf %8, %8 : vector<256x128xf32>
    %cst_5 = arith.constant dense<0.000000e+00> : vector<128xf32>
    %10 = vector.multi_reduction <add>, %9, %cst_5 [0] : vector<256x128xf32> to vector<128xf32>
    %11 = vector.shape_cast %10 : vector<128xf32> to vector<1x128xf32>
    %cst_6 = arith.constant 2.560000e+02 : f32
    %12 = vector.broadcast %cst_6 : f32 to vector<1x128xf32>
    %13 = arith.divf %11, %12 : vector<1x128xf32>
    %cst_7 = arith.constant 9.99999974E-5 : f32
    %14 = vector.broadcast %cst_7 : f32 to vector<1x128xf32>
    %15 = arith.addf %13, %14 : vector<1x128xf32>
    %16 = math.rsqrt %15 : vector<1x128xf32>
    %17 = vector.broadcast %16 : vector<1x128xf32> to vector<256x128xf32>
    %18 = arith.mulf %8, %17 : vector<256x128xf32>
    %cst_8 = arith.constant 0.000000e+00 : f32
    %19 = vector.broadcast %cst_8 : f32 to vector<256x128xf32>
    %20 = arith.cmpf oge, %18, %19 : vector<256x128xf32>
    %cst_9 = arith.constant 0.00999999977 : f32
    %21 = vector.broadcast %cst_9 : f32 to vector<256x128xf32>
    %22 = arith.mulf %21, %18 : vector<256x128xf32>
    %23 = arith.select %20, %18, %22 : vector<256x128xi1>, vector<256x128xf32>
    %c0_10 = arith.constant 0 : index
    %c0_11 = arith.constant 0 : index
    %24 = vector.load %arg2[%c0_10, %c0_11] : memref<256x128xf32, #tpu.memory_space<vmem>>, vector<256x128xf32>
    tpu.vector_store %arg2[%c0_10, %c0_11], %23 {strides = array<i32>} : memref<256x128xf32, #tpu.memory_space<vmem>>, vector<256x128xf32>,
    return
  }
}

</mosaic_0001>

<llo_original>
// kernel: tpu_custom_call.1
$region0: #{tpu_custom_call.1}
  #allocation0 [shape = 'u32[]', space=smem, size = 0x4, offset = 0x4, fixed_abs, tag = 'smem constant byte address 0x4 - core index']
  #allocation1 [shape = 'u32[144,128]{1,0:T(1,128)}', space=vmem, size = 0x12000, scoped, tag = 'internal scratch']
  %s0 = inlined_call_operand.hbm [shape: f32[256,256], index: 0, kind: input, shape index: {}]
  %s1 = inlined_call_operand.hbm [shape: f32[256,128], index: 1, kind: input, shape index: {}]
  %s2 = inlined_call_operand.hbm [shape: f32[256,128], index: 2, kind: output, shape index: {}]
  %s3 = sld [smem:[#allocation0]]
  $region26: #{tpu_custom_call.1} parent=0
    _
  %s5 = ssub.s32 1, %s3
  %s6 = scalar_select 0, %s5, %s3
  $region1: #{tpu_custom_call.1} parent=0
    #allocation2 [shape = 'u8[262144]{0}', space=vmem, size = 0x40000, scoped, tag = 'input window, operand 0, single buffered']
    #allocation3 [shape = 's32[1]{0}', space=sflag, size = 0x4, scoped, tag = 'scoped memory for tpu_custom_call.1']
    #allocation4 [shape = 's32[1]{0}', space=sflag, size = 0x4, scoped, tag = 'scoped memory for tpu_custom_call.1']
    #allocation5 [shape = 'u8[131072]{0}', space=vmem, size = 0x20000, scoped, tag = 'input window, operand 1, single buffered']
    #allocation6 [shape = 's32[1]{0}', space=sflag, size = 0x4, scoped, tag = 'scoped memory for tpu_custom_call.1']
    #allocation7 [shape = 'u8[131072]{0}', space=vmem, size = 0x20000, scoped, tag = 'output window, operand 0, single buffered']
    %7 = vsyncpa [#allocation3], 0
    %8 = vsyncpa [#allocation6], 0
    %9 = vsyncpa [#allocation4], 0
    // Predicated region
    $region2: #{tpu_custom_call.1} parent=1 // pred_check
      _
    $region3: #{tpu_custom_call.1} parent=1 // pred_check_branch
      %11 = sbr.rel (0) target = $region5
    $region4: #{tpu_custom_call.1} parent=1 // pred_region
      %s13 = ssub.s32 8192, 8192
      %14 = vsyncadd [#allocation3], %s13
      %s15 = sshll.u32 [#allocation2], 4
      %s16 = int_to_ptr.vmem [resolvable:$true] %s15
      %21 = dma.hbm_to_vmem [thread:$0]  %s0, 8192, %s16, [#allocation3], 256, 256, 16
    $region5: #{tpu_custom_call.1} parent=1 // pred_fallthru
      _
    // Predicated region
    $region6: #{tpu_custom_call.1} parent=1 // pred_check
      _
    $region7: #{tpu_custom_call.1} parent=1 // pred_check_branch
      %23 = sbr.rel (0) target = $region9
    $region8: #{tpu_custom_call.1} parent=1 // pred_region
      %s25 = ssub.s32 4096, 4096
      %26 = vsyncadd [#allocation6], %s25
      %s27 = sshll.u32 [#allocation5], 4
      %s28 = int_to_ptr.vmem [resolvable:$true] %s27
      %33 = dma.hbm_to_vmem [thread:$0]  %s1, 4096, %s28, [#allocation6], 128, 128, 8
    $region9: #{tpu_custom_call.1} parent=1 // pred_fallthru
      _
    // Predicated region
    $region10: #{tpu_custom_call.1} parent=1 // pred_check
      _
    $region11: #{tpu_custom_call.1} parent=1 // pred_check_branch
      %35 = sbr.rel (0) target = $region13
    $region12: #{tpu_custom_call.1} parent=1 // pred_region
      %36 = dma.done [#allocation3], 8192
    $region13: #{tpu_custom_call.1} parent=1 // pred_fallthru
      _
    // Predicated region
    $region14: #{tpu_custom_call.1} parent=1 // pred_check
      _
    $region15: #{tpu_custom_call.1} parent=1 // pred_check_branch
      %38 = sbr.rel (0) target = $region17
    $region16: #{tpu_custom_call.1} parent=1 // pred_region
      %39 = dma.done [#allocation6], 4096
    $region17: #{tpu_custom_call.1} parent=1 // pred_fallthru
      _
    %v40 = vld [vmem:[#allocation2] sm:$0xff]
    %v41 = vld [vmem:[#allocation2 + $0x8] sm:$0xff]
    %v42 = vld [vmem:[#allocation2 + $0x10] sm:$0xff]
    %v43 = vld [vmem:[#allocation2 + $0x18] sm:$0xff]
    %v44 = vld [vmem:[#allocation2 + $0x20] sm:$0xff]
    %v45 = vld [vmem:[#allocation2 + $0x28] sm:$0xff]
    %v46 = vld [vmem:[#allocation2 + $0x30] sm:$0xff]
    %v47 = vld [vmem:[#allocation2 + $0x38] sm:$0xff]
    %v48 = vld [vmem:[#allocation2 + $0x40] sm:$0xff]
    %v49 = vld [vmem:[#allocation2 + $0x48] sm:$0xff]
    %v50 = vld [vmem:[#allocation2 + $0x50] sm:$0xff]
    %v51 = vld [vmem:[#allocation2 + $0x58] sm:$0xff]
    %v52 = vld [vmem:[#allocation2 + $0x60] sm:$0xff]
    %v53 = vld [vmem:[#allocation2 + $0x68] sm:$0xff]
    %v54 = vld [vmem:[#allocation2 + $0x70] sm:$0xff]
    %v55 = vld [vmem:[#allocation2 + $0x78] sm:$0xff]
    %v56 = vld [vmem:[#allocation2 + $0x80] sm:$0xff]
    %v57 = vld [vmem:[#allocation2 + $0x88] sm:$0xff]
    %v58 = vld [vmem:[#allocation2 + $0x90] sm:$0xff]
    %v59 = vld [vmem:[#allocation2 + $0x98] sm:$0xff]
    %v60 = vld [vmem:[#allocation2 + $0xa0] sm:$0xff]
    %v61 = vld [vmem:[#allocation2 + $0xa8] sm:$0xff]
    %v62 = vld [vmem:[#allocation2 + $0xb0] sm:$0xff]
    %v63 = vld [vmem:[#allocation2 + $0xb8] sm:$0xff]
    %v64 = vld [vmem:[#allocation2 + $0xc0] sm:$0xff]
    %v65 = vld [vmem:[#allocation2 + $0xc8] sm:$0xff]
    %v66 = vld [vmem:[#allocation2 + $0xd0] sm:$0xff]
    %v67 = vld [vmem:[#allocation2 + $0xd8] sm:$0xff]
    %v68 = vld [vmem:[#allocation2 + $0xe0] sm:$0xff]
    %v69 = vld [vmem:[#allocation2 + $0xe8] sm:$0xff]
    %v70 = vld [vmem:[#allocation2 + $0xf0] sm:$0xff]
    %v71 = vld [vmem:[#allocation2 + $0xf8] sm:$0xff]
    %v72 = vld [vmem:[#allocation2 + $0x100] sm:$0xff]
    %v73 = vld [vmem:[#allocation2 + $0x108] sm:$0xff]
    %v74 = vld [vmem:[#allocation2 + $0x110] sm:$0xff]
    %v75 = vld [vmem:[#allocation2 + $0x118] sm:$0xff]
    %v76 = vld [vmem:[#allocation2 + $0x120] sm:$0xff]
    %v77 = vld [vmem:[#allocation2 + $0x128] sm:$0xff]
    %v78 = vld [vmem:[#allocation2 + $0x130] sm:$0xff]
    %v79 = vld [vmem:[#allocation2 + $0x138] sm:$0xff]
    %v80 = vld [vmem:[#allocation2 + $0x140] sm:$0xff]
    %v81 = vld [vmem:[#allocation2 + $0x148] sm:$0xff]
    %v82 = vld [vmem:[#allocation2 + $0x150] sm:$0xff]
    %v83 = vld [vmem:[#allocation2 + $0x158] sm:$0xff]
    %v84 = vld [vmem:[#allocation2 + $0x160] sm:$0xff]
    %v85 = vld [vmem:[#allocation2 + $0x168] sm:$0xff]
    %v86 = vld [vmem:[#allocation2 + $0x170] sm:$0xff]
    %v87 = vld [vmem:[#allocation2 + $0x178] sm:$0xff]
    %v88 = vld [vmem:[#allocation2 + $0x180] sm:$0xff]
    %v89 = vld [vmem:[#allocation2 + $0x188] sm:$0xff]
    %v90 = vld [vmem:[#allocation2 + $0x190] sm:$0xff]
    %v91 = vld [vmem:[#allocation2 + $0x198] sm:$0xff]
    %v92 = vld [vmem:[#allocation2 + $0x1a0] sm:$0xff]
    %v93 = vld [vmem:[#allocation2 + $0x1a8] sm:$0xff]
    %v94 = vld [vmem:[#allocation2 + $0x1b0] sm:$0xff]
    %v95 = vld [vmem:[#allocation2 + $0x1b8] sm:$0xff]
    %v96 = vld [vmem:[#allocation2 + $0x1c0] sm:$0xff]
    %v97 = vld [vmem:[#allocation2 + $0x1c8] sm:$0xff]
    %v98 = vld [vmem:[#allocation2 + $0x1d0] sm:$0xff]
    %v99 = vld [vmem:[#allocation2 + $0x1d8] sm:$0xff]
    %v100 = vld [vmem:[#allocation2 + $0x1e0] sm:$0xff]
    %v101 = vld [vmem:[#allocation2 + $0x1e8] sm:$0xff]
    %v102 = vld [vmem:[#allocation2 + $0x1f0] sm:$0xff]
    %v103 = vld [vmem:[#allocation2 + $0x1f8] sm:$0xff]
    %v104 = vld [vmem:[#allocation5] sm:$0xff]
    %v105 = vld [vmem:[#allocation5 + $0x8] sm:$0xff]
    %v106 = vld [vmem:[#allocation5 + $0x10] sm:$0xff]
    %v107 = vld [vmem:[#allocation5 + $0x18] sm:$0xff]
    %v108 = vld [vmem:[#allocation5 + $0x20] sm:$0xff]
    %v109 = vld [vmem:[#allocation5 + $0x28] sm:$0xff]
    %v110 = vld [vmem:[#allocation5 + $0x30] sm:$0xff]
    %v111 = vld [vmem:[#allocation5 + $0x38] sm:$0xff]
    %v112 = vld [vmem:[#allocation5 + $0x40] sm:$0xff]
    %v113 = vld [vmem:[#allocation5 + $0x48] sm:$0xff]
    %v114 = vld [vmem:[#allocation5 + $0x50] sm:$0xff]
    %v115 = vld [vmem:[#allocation5 + $0x58] sm:$0xff]
    %v116 = vld [vmem:[#allocation5 + $0x60] sm:$0xff]
    %v117 = vld [vmem:[#allocation5 + $0x68] sm:$0xff]
    %v118 = vld [vmem:[#allocation5 + $0x70] sm:$0xff]
    %v119 = vld [vmem:[#allocation5 + $0x78] sm:$0xff]
    %v120 = vld [vmem:[#allocation5 + $0x80] sm:$0xff]
    %v121 = vld [vmem:[#allocation5 + $0x88] sm:$0xff]
    %v122 = vld [vmem:[#allocation5 + $0x90] sm:$0xff]
    %v123 = vld [vmem:[#allocation5 + $0x98] sm:$0xff]
    %v124 = vld [vmem:[#allocation5 + $0xa0] sm:$0xff]
    %v125 = vld [vmem:[#allocation5 + $0xa8] sm:$0xff]
    %v126 = vld [vmem:[#allocation5 + $0xb0] sm:$0xff]
    %v127 = vld [vmem:[#allocation5 + $0xb8] sm:$0xff]
    %v128 = vld [vmem:[#allocation5 + $0xc0] sm:$0xff]
    %v129 = vld [vmem:[#allocation5 + $0xc8] sm:$0xff]
    %v130 = vld [vmem:[#allocation5 + $0xd0] sm:$0xff]
    %v131 = vld [vmem:[#allocation5 + $0xd8] sm:$0xff]
    %v132 = vld [vmem:[#allocation5 + $0xe0] sm:$0xff]
    %v133 = vld [vmem:[#allocation5 + $0xe8] sm:$0xff]
    %v134 = vld [vmem:[#allocation5 + $0xf0] sm:$0xff]
    %v135 = vld [vmem:[#allocation5 + $0xf8] sm:$0xff]
    %136 = vmatprep.subr.mxu0 0.0
    %137 = vmatpush1.msra.mxu0 %v104
    %138 = vmatprep.subr.mxu0 0.0
    %139 = vmatpush1.msra.mxu0 %v105
    %140 = vmatprep.subr.mxu0 0.0
    %141 = vmatpush1.msra.mxu0 %v106
    %142 = vmatprep.subr.mxu0 0.0
    %143 = vmatpush1.msra.mxu0 %v107
    %144 = vmatprep.subr.mxu0 0.0
    %145 = vmatpush1.msra.mxu0 %v108
    %146 = vmatprep.subr.mxu0 0.0
    %147 = vmatpush1.msra.mxu0 %v109
    %148 = vmatprep.subr.mxu0 0.0
    %149 = vmatpush1.msra.mxu0 %v110
    %150 = vmatprep.subr.mxu0 0.0
    %151 = vmatpush1.msra.mxu0 %v111
    %152 = vmatprep.subr.mxu0 0.0
    %153 = vmatpush1.msra.mxu0 %v112
    %154 = vmatprep.subr.mxu0 0.0
    %155 = vmatpush1.msra.mxu0 %v113
    %156 = vmatprep.subr.mxu0 0.0
    %157 = vmatpush1.msra.mxu0 %v114
    %158 = vmatprep.subr.mxu0 0.0
    %159 = vmatpush1.msra.mxu0 %v115
    %160 = vmatprep.subr.mxu0 0.0
    %161 = vmatpush1.msra.mxu0 %v116
    %162 = vmatprep.subr.mxu0 0.0
    %163 = vmatpush1.msra.mxu0 %v117
    %164 = vmatprep.subr.mxu0 0.0
    %165 = vmatpush1.msra.mxu0 %v118
    %166 = vmatprep.subr.mxu0 0.0
    %167 = vmatpush1.msra.mxu0 %v119
    %168 = vmatprep.subr.mxu0 0.0
    %169 = vmatpush1.msra.mxu0 %v120
    %170 = vmatprep.subr.mxu0 0.0
    %171 = vmatpush1.msra.mxu0 %v121
    %172 = vmatprep.subr.mxu0 0.0
    %173 = vmatpush1.msra.mxu0 %v122
    %174 = vmatprep.subr.mxu0 0.0
    %175 = vmatpush1.msra.mxu0 %v123
    %176 = vmatprep.subr.mxu0 0.0
    %177 = vmatpush1.msra.mxu0 %v124
    %178 = vmatprep.subr.mxu0 0.0
    %179 = vmatpush1.msra.mxu0 %v125
    %180 = vmatprep.subr.mxu0 0.0
    %181 = vmatpush1.msra.mxu0 %v126
    %182 = vmatprep.subr.mxu0 0.0
    %183 = vmatpush1.msra.mxu0 %v127
    %184 = vmatprep.subr.mxu0 0.0
    %185 = vmatpush1.msra.mxu0 %v128
    %186 = vmatprep.subr.mxu0 0.0
    %187 = vmatpush1.msra.mxu0 %v129
    %188 = vmatprep.subr.mxu0 0.0
    %189 = vmatpush1.msra.mxu0 %v130
    %190 = vmatprep.subr.mxu0 0.0
    %191 = vmatpush1.msra.mxu0 %v131
    %192 = vmatprep.subr.mxu0 0.0
    %193 = vmatpush1.msra.mxu0 %v132
    %194 = vmatprep.subr.mxu0 0.0
    %195 = vmatpush1.msra.mxu0 %v133
    %196 = vmatprep.subr.mxu0 0.0
    %197 = vmatpush1.msra.mxu0 %v134
    %198 = vmatprep.subr.mxu0 0.0
    %199 = vmatpush1.msra.mxu0 %v135
    %200 = vmatprep.mubr.f32.mxu0 %v41
    %201 = vmatmul.mubr.f32.gmra.mrb[0].mxu0 %v40
    %v202 = vpop.f32.mrb[0].mxu0
    %v203 = vadd.f32 0.0, %v202
    %v204 = vpop.f32.mrb[0].mxu0
    %205 = vmatprep.mubr.f32.mxu0 %v43
    %206 = vmatmul.mubr.f32.gmra.mrb[0].mxu0 %v42
    %v207 = vpop.f32.mrb[0].mxu0
    %v208 = vadd.f32 0.0, %v207
    %v209 = vpop.f32.mrb[0].mxu0
    %210 = vmatprep.mubr.f32.mxu0 %v45
    %211 = vmatmul.mubr.f32.gmra.mrb[0].mxu0 %v44
    %v212 = vpop.f32.mrb[0].mxu0
    %v213 = vadd.f32 0.0, %v212
    %v214 = vpop.f32.mrb[0].mxu0
    %215 = vmatprep.mubr.f32.mxu0 %v47
    %216 = vmatmul.mubr.f32.gmra.mrb[0].mxu0 %v46
    %v217 = vpop.f32.mrb[0].mxu0
    %v218 = vadd.f32 0.0, %v217
    %v219 = vpop.f32.mrb[0].mxu0
    %220 = vmatprep.mubr.f32.mxu0 %v49
    %221 = vmatmul.mubr.f32.gmra.mrb[0].mxu0 %v48
    %v222 = vpop.f32.mrb[0].mxu0
    %v223 = vadd.f32 0.0, %v222
    %v224 = vpop.f32.mrb[0].mxu0
    %225 = vmatprep.mubr.f32.mxu0 %v51
    %226 = vmatmul.mubr.f32.gmra.mrb[0].mxu0 %v50
    %v227 = vpop.f32.mrb[0].mxu0
    %v228 = vadd.f32 0.0, %v227
    %v229 = vpop.f32.mrb[0].mxu0
    %230 = vmatprep.mubr.f32.mxu0 %v53
    %231 = vmatmul.mubr.f32.gmra.mrb[0].mxu0 %v52
    %v232 = vpop.f32.mrb[0].mxu0
    %v233 = vadd.f32 0.0, %v232
    %v234 = vpop.f32.mrb[0].mxu0
    %235 = vmatprep.mubr.f32.mxu0 %v55
    %236 = vmatmul.mubr.f32.gmra.mrb[0].mxu0 %v54
    %v237 = vpop.f32.mrb[0].mxu0
    %v238 = vadd.f32 0.0, %v237
    %v239 = vpop.f32.mrb[0].mxu0
    %240 = vmatprep.mubr.f32.mxu0 %v57
    %241 = vmatmul.mubr.f32.gmra.mrb[0].mxu0 %v56
    %v242 = vpop.f32.mrb[0].mxu0
    %v243 = vadd.f32 0.0, %v242
    %v244 = vpop.f32.mrb[0].mxu0
    %245 = vmatprep.mubr.f32.mxu0 %v59
    %246 = vmatmul.mubr.f32.gmra.mrb[0].mxu0 %v58
    %v247 = vpop.f32.mrb[0].mxu0
    %v248 = vadd.f32 0.0, %v247
    %v249 = vpop.f32.mrb[0].mxu0
    %250 = vmatprep.mubr.f32.mxu0 %v61
    %251 = vmatmul.mubr.f32.gmra.mrb[0].mxu0 %v60
    %v252 = vpop.f32.mrb[0].mxu0
    %v253 = vadd.f32 0.0, %v252
    %v254 = vpop.f32.mrb[0].mxu0
    %255 = vmatprep.mubr.f32.mxu0 %v63
    %256 = vmatmul.mubr.f32.gmra.mrb[0].mxu0 %v62
    %v257 = vpop.f32.mrb[0].mxu0
    %v258 = vadd.f32 0.0, %v257
    %v259 = vpop.f32.mrb[0].mxu0
    %260 = vmatprep.mubr.f32.mxu0 %v65
    %261 = vmatmul.mubr.f32.gmra.mrb[0].mxu0 %v64
    %v262 = vpop.f32.mrb[0].mxu0
    %v263 = vadd.f32 0.0, %v262
    %v264 = vpop.f32.mrb[0].mxu0
    %265 = vmatprep.mubr.f32.mxu0 %v67
    %266 = vmatmul.mubr.f32.gmra.mrb[0].mxu0 %v66
    %v267 = vpop.f32.mrb[0].mxu0
    %v268 = vadd.f32 0.0, %v267
    %v269 = vpop.f32.mrb[0].mxu0
    %270 = vmatprep.mubr.f32.mxu0 %v69
    %271 = vmatmul.mubr.f32.gmra.mrb[0].mxu0 %v68
    %v272 = vpop.f32.mrb[0].mxu0
    %v273 = vadd.f32 0.0, %v272
    %v274 = vpop.f32.mrb[0].mxu0
    %275 = vmatprep.mubr.f32.mxu0 %v71
    %276 = vmatmul.mubr.f32.gmra.mrb[0].mxu0 %v70
    %v277 = vpop.f32.mrb[0].mxu0
    %v278 = vadd.f32 0.0, %v277
    %v279 = vpop.f32.mrb[0].mxu0
    %280 = vmatprep.mubr.f32.mxu0 %v73
    %281 = vmatmul.mubr.f32.gmra.mrb[0].mxu0 %v72
    %v282 = vpop.f32.mrb[0].mxu0
    %v283 = vadd.f32 0.0, %v282
    %v284 = vpop.f32.mrb[0].mxu0
    %285 = vmatprep.mubr.f32.mxu0 %v75
    %286 = vmatmul.mubr.f32.gmra.mrb[0].mxu0 %v74
    %v287 = vpop.f32.mrb[0].mxu0
    %v288 = vadd.f32 0.0, %v287
    %v289 = vpop.f32.mrb[0].mxu0
    %290 = vmatprep.mubr.f32.mxu0 %v77
    %291 = vmatmul.mubr.f32.gmra.mrb[0].mxu0 %v76
    %v292 = vpop.f32.mrb[0].mxu0
    %v293 = vadd.f32 0.0, %v292
    %v294 = vpop.f32.mrb[0].mxu0
    %295 = vmatprep.mubr.f32.mxu0 %v79
    %296 = vmatmul.mubr.f32.gmra.mrb[0].mxu0 %v78
    %v297 = vpop.f32.mrb[0].mxu0
    %v298 = vadd.f32 0.0, %v297
    %v299 = vpop.f32.mrb[0].mxu0
    %300 = vmatprep.mubr.f32.mxu0 %v81
    %301 = vmatmul.mubr.f32.gmra.mrb[0].mxu0 %v80
    %v302 = vpop.f32.mrb[0].mxu0
    %v303 = vadd.f32 0.0, %v302
    %v304 = vpop.f32.mrb[0].mxu0
    %305 = vmatprep.mubr.f32.mxu0 %v83
    %306 = vmatmul.mubr.f32.gmra.mrb[0].mxu0 %v82
    %v307 = vpop.f32.mrb[0].mxu0
    %v308 = vadd.f32 0.0, %v307
    %v309 = vpop.f32.mrb[0].mxu0
    %310 = vmatprep.mubr.f32.mxu0 %v85
    %311 = vmatmul.mubr.f32.gmra.mrb[0].mxu0 %v84
    %v312 = vpop.f32.mrb[0].mxu0
    %v313 = vadd.f32 0.0, %v312
    %v314 = vpop.f32.mrb[0].mxu0
    %315 = vmatprep.mubr.f32.mxu0 %v87
    %316 = vmatmul.mubr.f32.gmra.mrb[0].mxu0 %v86
    %v317 = vpop.f32.mrb[0].mxu0
    %v318 = vadd.f32 0.0, %v317
    %v319 = vpop.f32.mrb[0].mxu0
    %320 = vmatprep.mubr.f32.mxu0 %v89
    %321 = vmatmul.mubr.f32.gmra.mrb[0].mxu0 %v88
    %v322 = vpop.f32.mrb[0].mxu0
    %v323 = vadd.f32 0.0, %v322
    %v324 = vpop.f32.mrb[0].mxu0
    %325 = vmatprep.mubr.f32.mxu0 %v91
    %326 = vmatmul.mubr.f32.gmra.mrb[0].mxu0 %v90
    %v327 = vpop.f32.mrb[0].mxu0
    %v328 = vadd.f32 0.0, %v327
    %v329 = vpop.f32.mrb[0].mxu0
    %330 = vmatprep.mubr.f32.mxu0 %v93
    %331 = vmatmul.mubr.f32.gmra.mrb[0].mxu0 %v92
    %v332 = vpop.f32.mrb[0].mxu0
    %v333 = vadd.f32 0.0, %v332
    %v334 = vpop.f32.mrb[0].mxu0
    %335 = vmatprep.mubr.f32.mxu0 %v95
    %336 = vmatmul.mubr.f32.gmra.mrb[0].mxu0 %v94
    %v337 = vpop.f32.mrb[0].mxu0
    %v338 = vadd.f32 0.0, %v337
    %v339 = vpop.f32.mrb[0].mxu0
    %340 = vmatprep.mubr.f32.mxu0 %v97
    %341 = vmatmul.mubr.f32.gmra.mrb[0].mxu0 %v96
    %v342 = vpop.f32.mrb[0].mxu0
    %v343 = vadd.f32 0.0, %v342
    %v344 = vpop.f32.mrb[0].mxu0
    %345 = vmatprep.mubr.f32.mxu0 %v99
    %346 = vmatmul.mubr.f32.gmra.mrb[0].mxu0 %v98
    %v347 = vpop.f32.mrb[0].mxu0
    %v348 = vadd.f32 0.0, %v347
    %v349 = vpop.f32.mrb[0].mxu0
    %350 = vmatprep.mubr.f32.mxu0 %v101
    %351 = vmatmul.mubr.f32.gmra.mrb[0].mxu0 %v100
    %v352 = vpop.f32.mrb[0].mxu0
    %v353 = vadd.f32 0.0, %v352
    %v354 = vpop.f32.mrb[0].mxu0
    %355 = vmatprep.mubr.f32.mxu0 %v103
    %356 = vmatmul.mubr.f32.gmra.mrb[0].mxu0 %v102
    %v357 = vpop.f32.mrb[0].mxu0
    %v358 = vadd.f32 0.0, %v357
    %v359 = vpop.f32.mrb[0].mxu0
    %360 = vdwg.mxu0
    %v361 = vadd.f32 %v203, %v208
    %v362 = vadd.f32 %v361, %v213
    %v363 = vadd.f32 %v362, %v218
    %v364 = vadd.f32 %v363, %v223
    %v365 = vadd.f32 %v364, %v228
    %v366 = vadd.f32 %v365, %v233
    %v367 = vadd.f32 %v366, %v238
    %v368 = vadd.f32 %v367, %v243
    %v369 = vadd.f32 %v368, %v248
    %v370 = vadd.f32 %v369, %v253
    %v371 = vadd.f32 %v370, %v258
    %v372 = vadd.f32 %v371, %v263
    %v373 = vadd.f32 %v372, %v268
    %v374 = vadd.f32 %v373, %v273
    %v375 = vadd.f32 %v374, %v278
    %v376 = vadd.f32 %v375, %v283
    %v377 = vadd.f32 %v376, %v288
    %v378 = vadd.f32 %v377, %v293
    %v379 = vadd.f32 %v378, %v298
    %v380 = vadd.f32 %v379, %v303
    %v381 = vadd.f32 %v380, %v308
    %v382 = vadd.f32 %v381, %v313
    %v383 = vadd.f32 %v382, %v318
    %v384 = vadd.f32 %v383, %v323
    %v385 = vadd.f32 %v384, %v328
    %v386 = vadd.f32 %v385, %v333
    %v387 = vadd.f32 %v386, %v338
    %v388 = vadd.f32 %v387, %v343
    %v389 = vadd.f32 %v388, %v348
    %v390 = vadd.f32 %v389, %v353
    %v391 = vadd.f32 %v390, %v358
    %v392 = vrot.slane %v391, 4
    %v393 = vadd.f32 %v391, %v392
    %v394 = vrot.slane %v393, 2
    %v395 = vadd.f32 %v393, %v394
    %v396 = vrot.slane %v395, 1
    %v397 = vadd.f32 %v395, %v396
    %v398 = vrcp.pop 256.0
    %v399 = vmul.f32 %v397, %v398
    %v400 = vsub.f32 %v203, %v399
    %v401 = vsub.f32 %v208, %v399
    %v402 = vsub.f32 %v213, %v399
    %v403 = vsub.f32 %v218, %v399
    %v404 = vsub.f32 %v223, %v399
    %v405 = vsub.f32 %v228, %v399
    %v406 = vsub.f32 %v233, %v399
    %v407 = vsub.f32 %v238, %v399
    %v408 = vsub.f32 %v243, %v399
    %v409 = vsub.f32 %v248, %v399
    %v410 = vsub.f32 %v253, %v399
    %v411 = vsub.f32 %v258, %v399
    %v412 = vsub.f32 %v263, %v399
    %v413 = vsub.f32 %v268, %v399
    %v414 = vsub.f32 %v273, %v399
    %v415 = vsub.f32 %v278, %v399
    %v416 = vsub.f32 %v283, %v399
    %v417 = vsub.f32 %v288, %v399
    %v418 = vsub.f32 %v293, %v399
    %v419 = vsub.f32 %v298, %v399
    %v420 = vsub.f32 %v303, %v399
    %v421 = vsub.f32 %v308, %v399
    %v422 = vsub.f32 %v313, %v399
    %v423 = vsub.f32 %v318, %v399
    %v424 = vsub.f32 %v323, %v399
    %v425 = vsub.f32 %v328, %v399
    %v426 = vsub.f32 %v333, %v399
    %v427 = vsub.f32 %v338, %v399
    %v428 = vsub.f32 %v343, %v399
    %v429 = vsub.f32 %v348, %v399
    %v430 = vsub.f32 %v353, %v399
    %v431 = vsub.f32 %v358, %v399
    %v432 = vmul.f32 %v400, %v400
    %v433 = vmul.f32 %v401, %v401
    %v434 = vmul.f32 %v402, %v402
    %v435 = vmul.f32 %v403, %v403
    %v436 = vmul.f32 %v404, %v404
    %v437 = vmul.f32 %v405, %v405
    %v438 = vmul.f32 %v406, %v406
    %v439 = vmul.f32 %v407, %v407
    %v440 = vmul.f32 %v408, %v408
    %v441 = vmul.f32 %v409, %v409
    %v442 = vmul.f32 %v410, %v410
    %v443 = vmul.f32 %v411, %v411
    %v444 = vmul.f32 %v412, %v412
    %v445 = vmul.f32 %v413, %v413
    %v446 = vmul.f32 %v414, %v414
    %v447 = vmul.f32 %v415, %v415
    %v448 = vmul.f32 %v416, %v416
    %v449 = vmul.f32 %v417, %v417
    %v450 = vmul.f32 %v418, %v418
    %v451 = vmul.f32 %v419, %v419
    %v452 = vmul.f32 %v420, %v420
    %v453 = vmul.f32 %v421, %v421
    %v454 = vmul.f32 %v422, %v422
    %v455 = vmul.f32 %v423, %v423
    %v456 = vmul.f32 %v424, %v424
    %v457 = vmul.f32 %v425, %v425
    %v458 = vmul.f32 %v426, %v426
    %v459 = vmul.f32 %v427, %v427
    %v460 = vmul.f32 %v428, %v428
    %v461 = vmul.f32 %v429, %v429
    %v462 = vmul.f32 %v430, %v430
    %v463 = vmul.f32 %v431, %v431
    %v464 = vadd.f32 %v432, %v433
    %v465 = vadd.f32 %v464, %v434
    %v466 = vadd.f32 %v465, %v435
    %v467 = vadd.f32 %v466, %v436
    %v468 = vadd.f32 %v467, %v437
    %v469 = vadd.f32 %v468, %v438
    %v470 = vadd.f32 %v469, %v439
    %v471 = vadd.f32 %v470, %v440
    %v472 = vadd.f32 %v471, %v441
    %v473 = vadd.f32 %v472, %v442
    %v474 = vadd.f32 %v473, %v443
    %v475 = vadd.f32 %v474, %v444
    %v476 = vadd.f32 %v475, %v445
    %v477 = vadd.f32 %v476, %v446
    %v478 = vadd.f32 %v477, %v447
    %v479 = vadd.f32 %v478, %v448
    %v480 = vadd.f32 %v479, %v449
    %v481 = vadd.f32 %v480, %v450
    %v482 = vadd.f32 %v481, %v451
    %v483 = vadd.f32 %v482, %v452
    %v484 = vadd.f32 %v483, %v453
    %v485 = vadd.f32 %v484, %v454
    %v486 = vadd.f32 %v485, %v455
    %v487 = vadd.f32 %v486, %v456
    %v488 = vadd.f32 %v487, %v457
    %v489 = vadd.f32 %v488, %v458
    %v490 = vadd.f32 %v489, %v459
    %v491 = vadd.f32 %v490, %v460
    %v492 = vadd.f32 %v491, %v461
    %v493 = vadd.f32 %v492, %v462
    %v494 = vadd.f32 %v493, %v463
    %v495 = vrot.slane %v494, 4
    %v496 = vadd.f32 %v494, %v495
    %v497 = vrot.slane %v496, 2
    %v498 = vadd.f32 %v496, %v497
    %v499 = vrot.slane %v498, 1
    %v500 = vadd.f32 %v498, %v499
    %v501 = vmul.f32 %v500, %v398
    %v502 = vadd.f32 %v501, 0.0001
    %v503 = vrsqrt.pop %v502
    %v504 = vmul.f32 %v400, %v503
    %v505 = vmul.f32 %v401, %v503
    %v506 = vmul.f32 %v402, %v503
    %v507 = vmul.f32 %v403, %v503
    %v508 = vmul.f32 %v404, %v503
    %v509 = vmul.f32 %v405, %v503
    %v510 = vmul.f32 %v406, %v503
    %v511 = vmul.f32 %v407, %v503
    %v512 = vmul.f32 %v408, %v503
    %v513 = vmul.f32 %v409, %v503
    %v514 = vmul.f32 %v410, %v503
    %v515 = vmul.f32 %v411, %v503
    %v516 = vmul.f32 %v412, %v503
    %v517 = vmul.f32 %v413, %v503
    %v518 = vmul.f32 %v414, %v503
    %v519 = vmul.f32 %v415, %v503
    %v520 = vmul.f32 %v416, %v503
    %v521 = vmul.f32 %v417, %v503
    %v522 = vmul.f32 %v418, %v503
    %v523 = vmul.f32 %v419, %v503
    %v524 = vmul.f32 %v420, %v503
    %v525 = vmul.f32 %v421, %v503
    %v526 = vmul.f32 %v422, %v503
    %v527 = vmul.f32 %v423, %v503
    %v528 = vmul.f32 %v424, %v503
    %v529 = vmul.f32 %v425, %v503
    %v530 = vmul.f32 %v426, %v503
    %v531 = vmul.f32 %v427, %v503
    %v532 = vmul.f32 %v428, %v503
    %v533 = vmul.f32 %v429, %v503
    %v534 = vmul.f32 %v430, %v503
    %v535 = vmul.f32 %v431, %v503
    %vm536 = vcmp.ge.f32.partialorder %v504, 0.0
    %vm537 = vcmp.ge.f32.partialorder %v505, 0.0
    %vm538 = vcmp.ge.f32.partialorder %v506, 0.0
    %vm539 = vcmp.ge.f32.partialorder %v507, 0.0
    %vm540 = vcmp.ge.f32.partialorder %v508, 0.0
    %vm541 = vcmp.ge.f32.partialorder %v509, 0.0
    %vm542 = vcmp.ge.f32.partialorder %v510, 0.0
    %vm543 = vcmp.ge.f32.partialorder %v511, 0.0
    %vm544 = vcmp.ge.f32.partialorder %v512, 0.0
    %vm545 = vcmp.ge.f32.partialorder %v513, 0.0
    %vm546 = vcmp.ge.f32.partialorder %v514, 0.0
    %vm547 = vcmp.ge.f32.partialorder %v515, 0.0
    %vm548 = vcmp.ge.f32.partialorder %v516, 0.0
    %vm549 = vcmp.ge.f32.partialorder %v517, 0.0
    %vm550 = vcmp.ge.f32.partialorder %v518, 0.0
    %vm551 = vcmp.ge.f32.partialorder %v519, 0.0
    %vm552 = vcmp.ge.f32.partialorder %v520, 0.0
    %vm553 = vcmp.ge.f32.partialorder %v521, 0.0
    %vm554 = vcmp.ge.f32.partialorder %v522, 0.0
    %vm555 = vcmp.ge.f32.partialorder %v523, 0.0
    %vm556 = vcmp.ge.f32.partialorder %v524, 0.0
    %vm557 = vcmp.ge.f32.partialorder %v525, 0.0
    %vm558 = vcmp.ge.f32.partialorder %v526, 0.0
    %vm559 = vcmp.ge.f32.partialorder %v527, 0.0
    %vm560 = vcmp.ge.f32.partialorder %v528, 0.0
    %vm561 = vcmp.ge.f32.partialorder %v529, 0.0
    %vm562 = vcmp.ge.f32.partialorder %v530, 0.0
    %vm563 = vcmp.ge.f32.partialorder %v531, 0.0
    %vm564 = vcmp.ge.f32.partialorder %v532, 0.0
    %vm565 = vcmp.ge.f32.partialorder %v533, 0.0
    %vm566 = vcmp.ge.f32.partialorder %v534, 0.0
    %vm567 = vcmp.ge.f32.partialorder %v535, 0.0
    %v568 = vmul.f32 %v504, 0.01
    %v569 = vmul.f32 %v505, 0.01
    %v570 = vmul.f32 %v506, 0.01
    %v571 = vmul.f32 %v507, 0.01
    %v572 = vmul.f32 %v508, 0.01
    %v573 = vmul.f32 %v509, 0.01
    %v574 = vmul.f32 %v510, 0.01
    %v575 = vmul.f32 %v511, 0.01
    %v576 = vmul.f32 %v512, 0.01
    %v577 = vmul.f32 %v513, 0.01
    %v578 = vmul.f32 %v514, 0.01
    %v579 = vmul.f32 %v515, 0.01
    %v580 = vmul.f32 %v516, 0.01
    %v581 = vmul.f32 %v517, 0.01
    %v582 = vmul.f32 %v518, 0.01
    %v583 = vmul.f32 %v519, 0.01
    %v584 = vmul.f32 %v520, 0.01
    %v585 = vmul.f32 %v521, 0.01
    %v586 = vmul.f32 %v522, 0.01
    %v587 = vmul.f32 %v523, 0.01
    %v588 = vmul.f32 %v524, 0.01
    %v589 = vmul.f32 %v525, 0.01
    %v590 = vmul.f32 %v526, 0.01
    %v591 = vmul.f32 %v527, 0.01
    %v592 = vmul.f32 %v528, 0.01
    %v593 = vmul.f32 %v529, 0.01
    %v594 = vmul.f32 %v530, 0.01
    %v595 = vmul.f32 %v531, 0.01
    %v596 = vmul.f32 %v532, 0.01
    %v597 = vmul.f32 %v533, 0.01
    %v598 = vmul.f32 %v534, 0.01
    %v599 = vmul.f32 %v535, 0.01
    %v600 = vsel %vm536, %v504, %v568
    %v601 = vsel %vm537, %v505, %v569
    %v602 = vsel %vm538, %v506, %v570
    %v603 = vsel %vm539, %v507, %v571
    %v604 = vsel %vm540, %v508, %v572
    %v605 = vsel %vm541, %v509, %v573
    %v606 = vsel %vm542, %v510, %v574
    %v607 = vsel %vm543, %v511, %v575
    %v608 = vsel %vm544, %v512, %v576
    %v609 = vsel %vm545, %v513, %v577
    %v610 = vsel %vm546, %v514, %v578
    %v611 = vsel %vm547, %v515, %v579
    %v612 = vsel %vm548, %v516, %v580
    %v613 = vsel %vm549, %v517, %v581
    %v614 = vsel %vm550, %v518, %v582
    %v615 = vsel %vm551, %v519, %v583
    %v616 = vsel %vm552, %v520, %v584
    %v617 = vsel %vm553, %v521, %v585
    %v618 = vsel %vm554, %v522, %v586
    %v619 = vsel %vm555, %v523, %v587
    %v620 = vsel %vm556, %v524, %v588
    %v621 = vsel %vm557, %v525, %v589
    %v622 = vsel %vm558, %v526, %v590
    %v623 = vsel %vm559, %v527, %v591
    %v624 = vsel %vm560, %v528, %v592
    %v625 = vsel %vm561, %v529, %v593
    %v626 = vsel %vm562, %v530, %v594
    %v627 = vsel %vm563, %v531, %v595
    %v628 = vsel %vm564, %v532, %v596
    %v629 = vsel %vm565, %v533, %v597
    %v630 = vsel %vm566, %v534, %v598
    %v631 = vsel %vm567, %v535, %v599
    %632 = vst [vmem:[#allocation7] sm:$0xff] %v600
    %633 = vst [vmem:[#allocation7 + $0x8] sm:$0xff] %v601
    %634 = vst [vmem:[#allocation7 + $0x10] sm:$0xff] %v602
    %635 = vst [vmem:[#allocation7 + $0x18] sm:$0xff] %v603
    %636 = vst [vmem:[#allocation7 + $0x20] sm:$0xff] %v604
    %637 = vst [vmem:[#allocation7 + $0x28] sm:$0xff] %v605
    %638 = vst [vmem:[#allocation7 + $0x30] sm:$0xff] %v606
    %639 = vst [vmem:[#allocation7 + $0x38] sm:$0xff] %v607
    %640 = vst [vmem:[#allocation7 + $0x40] sm:$0xff] %v608
    %641 = vst [vmem:[#allocation7 + $0x48] sm:$0xff] %v609
    %642 = vst [vmem:[#allocation7 + $0x50] sm:$0xff] %v610
    %643 = vst [vmem:[#allocation7 + $0x58] sm:$0xff] %v611
    %644 = vst [vmem:[#allocation7 + $0x60] sm:$0xff] %v612
    %645 = vst [vmem:[#allocation7 + $0x68] sm:$0xff] %v613
    %646 = vst [vmem:[#allocation7 + $0x70] sm:$0xff] %v614
    %647 = vst [vmem:[#allocation7 + $0x78] sm:$0xff] %v615
    %648 = vst [vmem:[#allocation7 + $0x80] sm:$0xff] %v616
    %649 = vst [vmem:[#allocation7 + $0x88] sm:$0xff] %v617
    %650 = vst [vmem:[#allocation7 + $0x90] sm:$0xff] %v618
    %651 = vst [vmem:[#allocation7 + $0x98] sm:$0xff] %v619
    %652 = vst [vmem:[#allocation7 + $0xa0] sm:$0xff] %v620
    %653 = vst [vmem:[#allocation7 + $0xa8] sm:$0xff] %v621
    %654 = vst [vmem:[#allocation7 + $0xb0] sm:$0xff] %v622
    %655 = vst [vmem:[#allocation7 + $0xb8] sm:$0xff] %v623
    %656 = vst [vmem:[#allocation7 + $0xc0] sm:$0xff] %v624
    %657 = vst [vmem:[#allocation7 + $0xc8] sm:$0xff] %v625
    %658 = vst [vmem:[#allocation7 + $0xd0] sm:$0xff] %v626
    %659 = vst [vmem:[#allocation7 + $0xd8] sm:$0xff] %v627
    %660 = vst [vmem:[#allocation7 + $0xe0] sm:$0xff] %v628
    %661 = vst [vmem:[#allocation7 + $0xe8] sm:$0xff] %v629
    %662 = vst [vmem:[#allocation7 + $0xf0] sm:$0xff] %v630
    %663 = vst [vmem:[#allocation7 + $0xf8] sm:$0xff] %v631
    // Predicated region
    $region18: #{tpu_custom_call.1} parent=1 // pred_check
      _
    $region19: #{tpu_custom_call.1} parent=1 // pred_check_branch
      %665 = sbr.rel (0) target = $region21
    $region20: #{tpu_custom_call.1} parent=1 // pred_region
      %s667 = ssub.s32 4096, 4096
      %668 = vsyncadd [#allocation4], %s667
      %s669 = sshll.u32 [#allocation7], 4
      %s670 = int_to_ptr.vmem [resolvable:$true] %s669
      %675 = dma.vmem_to_hbm [thread:$0]  %s670, 4096, %s2, [#allocation4], 128, 128, 8
    $region21: #{tpu_custom_call.1} parent=1 // pred_fallthru
      _
    // Predicated region
    $region22: #{tpu_custom_call.1} parent=1 // pred_check
      _
    $region23: #{tpu_custom_call.1} parent=1 // pred_check_branch
      %677 = sbr.rel (0) target = $region25
    $region24: #{tpu_custom_call.1} parent=1 // pred_region
      %678 = dma.done [#allocation4], 4096
    $region25: #{tpu_custom_call.1} parent=1 // pred_fallthru
      _
    %679 = vsyncpa [#allocation3], 1
    %680 = vsyncpa [#allocation6], 1
    %681 = vsyncpa [#allocation4], 1

</llo_original>
